<compile_context>
chip_gen: v7x
topology: tpu7x:2x2x1
jax: 0.10.0
libtpu: 0.0.40
codegen_flags: <defaults>
</compile_context>

<pallas_src>
import jax
import jax.numpy as jnp
from jax.experimental import pallas as pl
from jax.experimental.pallas import tpu as pltpu


def _lora_kernel(scale_ref, x_ref, a_ref, b_ref, o_ref):
    """One (tm, tn) output tile: o = (scale * (x @ A)) @ B, f32 MXU accumulation."""
    # (tm, K) @ (K, R) -> (tm, R), f32 accumulation on the MXU.
    xa = jnp.dot(x_ref[...], a_ref[...], preferred_element_type=jnp.float32)
    # Scale the tiny (tm, R) intermediate instead of the (tm, tn) result:
    # N/R fewer VPU multiplies, mathematically identical.
    xa = (xa * scale_ref[0]).astype(b_ref.dtype)
    # (tm, R) @ (R, tn) -> (tm, tn), f32 accumulation, cast on store.
    o_ref[...] = jnp.dot(
        xa, b_ref[...], preferred_element_type=jnp.float32
    ).astype(o_ref.dtype)


def _vmem_capacity_bytes():
    try:
        return int(pltpu.get_tpu_info().vmem_capacity_bytes)
    except Exception:
        return 64 << 20  # conservative default (v7x per-TensorCore VMEM)


def _select_tiles(M, K, R, N, in_bytes, out_bytes, vmem_budget):
    """Pick (tm, tn) so double-buffered tiles + resident A/B fit the VMEM budget."""
    # Lane-dense output tile: whole N when small, otherwise a multiple of 128.
    if N <= 512:
        tn = N
    else:
        for cand in (512, 1024, 256, 128):
            if N % cand == 0:
                tn = cand
                break
        else:
            tn = 128  # N gets zero-padded up to a multiple of 128
    # Per-batch-row VMEM cost: double-buffered x tile + double-buffered out tile + xa.
    per_row = 2 * K * in_bytes + 2 * tn * out_bytes + 4 * R
    fixed = K * R * in_bytes + 2 * R * tn * in_bytes  # resident A + double-buffered B
    avail = max(vmem_budget - fixed, 8 * per_row)
    tm = int(min(1024, avail // per_row))
    if tm >= 128:
        tm = (tm // 128) * 128          # MXU / (8,128) vreg aligned (helps v5e most)
    else:
        tm = max(8, (tm // 8) * 8)
    tm = min(tm, -(-M // 8) * 8)        # never tile past the (8-padded) batch
    tm = max(8, (tm // 8) * 8)
    return tm, tn


def lora_forward(x, A, B, scaling, *, compute_dtype=None, interpret=False):
    """scaling * (x @ A @ B) as one fused Pallas TPU kernel.

    compute_dtype=jnp.bfloat16 halves HBM traffic for the (mem-bound) x / y
    streams while keeping f32 MXU accumulation.
    """
    if compute_dtype is not None:
        x = x.astype(compute_dtype)
        A = A.astype(compute_dtype)
        B = B.astype(compute_dtype)
    out_dtype = x.dtype

    M, K = x.shape
    Ka, R = A.shape
    Rb, N = B.shape
    assert K == Ka and R == Rb, "shape mismatch"

    in_bytes = jnp.dtype(x.dtype).itemsize
    out_bytes = jnp.dtype(out_dtype).itemsize
    vmem_phys = _vmem_capacity_bytes()
    # Keep the working set well under per-generation physical VMEM
    # (v7x: 64 MiB, v5e/v6e: 128 MiB), leaving headroom for Mosaic scratch.
    tm, tn = _select_tiles(M, K, R, N, in_bytes, out_bytes,
                           vmem_budget=int(0.4 * vmem_phys))

    # Pad batch / output dims so the grid divides evenly; zero rows/cols are
    # computed and sliced off (numerically inert).
    Mp = -(-M // tm) * tm
    Np = -(-N // tn) * tn
    if Mp != M:
        x = jnp.pad(x, ((0, Mp - M), (0, 0)))
    if Np != N:
        B = jnp.pad(B, ((0, 0), (0, Np - N)))

    grid = (Mp // tm, Np // tn)

    # Working-set estimate -> raise the scoped VMEM limit to match
    # (defaults are only 16/32 MiB on v5e / v6e-v7x).
    footprint = (2 * tm * K * in_bytes + 2 * tm * tn * out_bytes
                 + K * R * in_bytes + 2 * R * tn * in_bytes)
    vmem_limit = int(min(0.75 * vmem_phys, max(32 << 20, 2 * footprint)))

    cost = pl.CostEstimate(
        flops=2 * M * K * R + 2 * M * R * N,
        transcendentals=0,
        bytes_accessed=(M * K * in_bytes + K * R * in_bytes
                        + R * N * in_bytes + M * N * out_bytes),
    )

    # Scaling goes in as a scalar-prefetch (SMEM) operand so a new alpha/rank
    # value does not force a retrace/recompile.
    scale_arr = jnp.asarray([scaling], dtype=jnp.float32)

    out = pl.pallas_call(
        _lora_kernel,
        out_shape=jax.ShapeDtypeStruct((Mp, Np), out_dtype),
        grid_spec=pltpu.PrefetchScalarGridSpec(
            num_scalar_prefetch=1,
            grid=grid,
            in_specs=[
                pl.BlockSpec((tm, K), lambda i, j, s: (i, 0)),   # x row tile
                pl.BlockSpec((K, R), lambda i, j, s: (0, 0)),    # A, VMEM-resident
                pl.BlockSpec((R, tn), lambda i, j, s: (0, j)),   # B column tile
            ],
            out_specs=pl.BlockSpec((tm, tn), lambda i, j, s: (i, j)),
        ),
        compiler_params=pltpu.CompilerParams(
            dimension_semantics=("parallel", "parallel"),
            vmem_limit_bytes=vmem_limit,
        ),
        cost_estimate=cost,
        interpret=interpret,
    )(scale_arr, x, A, B)

    if Mp != M or Np != N:
        out = out[:M, :N]
    return out


if __name__ == "__main__":
    # Small shapes consistent with the module's forward.
    batch, input_dim, output_dim, rank, alpha = 16, 32, 64, 4, 8
    scaling = alpha / rank

    key = jax.random.PRNGKey(0)
    kx, ka, kb = jax.random.split(key, 3)

    x = jax.random.normal(kx, (batch, input_dim), dtype=jnp.float32)

    # Deterministic parameter init mirroring the PyTorch module:
    #   A ~ Normal(0, 1), B = zeros (so the LoRA delta starts at 0).
    A = jax.random.normal(ka, (input_dim, rank), dtype=jnp.float32)
    B = jnp.zeros((rank, output_dim), dtype=jnp.float32)

    y = jax.block_until_ready(lora_forward(x, A, B, scaling))
    y_ref = scaling * (x @ A @ B)
    assert y.shape == (batch, output_dim)
    assert jnp.allclose(y, y_ref, atol=1e-5), "mismatch vs reference (zero-B case)"

    # Non-trivial B (deterministic) so the fused matmul path is validated.
    B2 = jax.random.normal(kb, (rank, output_dim), dtype=jnp.float32)
    y2 = jax.block_until_ready(lora_forward(x, A, B2, scaling))
    y2_ref = scaling * (x @ A @ B2)
    assert jnp.allclose(y2, y2_ref, atol=1e-4, rtol=1e-4), "mismatch vs reference"

    # Ragged batch (exercises padding) + bf16 compute path (f32 accumulation).
    x3 = jax.random.normal(kx, (batch + 3, input_dim), dtype=jnp.float32)
    y3 = jax.block_until_ready(
        lora_forward(x3, A, B2, scaling, compute_dtype=jnp.bfloat16))
    y3_ref = scaling * (x3 @ A @ B2)
    assert y3.shape == (batch + 3, output_dim)
    assert jnp.allclose(y3.astype(jnp.float32), y3_ref, atol=0.5, rtol=0.1), \
        "mismatch vs reference (bf16 path)"

    print("KERNEL_OK")
</pallas_src>

<mosaic_0001>
module attributes {stable_mosaic.version = 11 : i64} {
  func.func @_lora_kernel(%arg0: i32, %arg1: i32, %arg2: memref<1xf32, #tpu.memory_space<smem>>, %arg3: memref<16x32xf32, #tpu.memory_space<vmem>>, %arg4: memref<32x4xf32, #tpu.memory_space<vmem>>, %arg5: memref<4x64xf32, #tpu.memory_space<vmem>>, %arg6: memref<16x64xf32, #tpu.memory_space<vmem>>) attributes {dimension_semantics = [#tpu.dimension_semantics<parallel>, #tpu.dimension_semantics<parallel>], iteration_bounds = array<i64: 1, 1>, scalar_prefetch = 1 : i64, scratch_operands = 0 : i64, tpu.core_type = #tpu.core_type<tc>, window_params = [{transform_indices = @transform_0, window_bounds = array<i64: 16, 32>}, {pipeline_mode = #tpu.pipeline_mode<synchronous>, transform_indices = @transform_1, window_bounds = array<i64: 32, 4>}, {transform_indices = @transform_2, window_bounds = array<i64: 4, 64>}, {transform_indices = @transform_3, window_bounds = array<i64: 16, 64>}]} {
    %c0 = arith.constant 0 : index
    %c0_0 = arith.constant 0 : index
    %0 = vector.load %arg3[%c0, %c0_0] : memref<16x32xf32, #tpu.memory_space<vmem>>, vector<16x32xf32>
    %c0_1 = arith.constant 0 : index
    %c0_2 = arith.constant 0 : index
    %1 = vector.load %arg4[%c0_1, %c0_2] : memref<32x4xf32, #tpu.memory_space<vmem>>, vector<32x4xf32>
    %cst = arith.constant dense<0.000000e+00> : vector<16x4xf32>
    %2 = tpu.matmul %0, %1, %cst {dimension_numbers = #tpu.dot_dimension_numbers<[1], [0], [0], [1], [0, 0, 1, 1], [], []>} : vector<16x32xf32>, vector<32x4xf32>, vector<16x4xf32> -> vector<16x4xf32>
    %c0_3 = arith.constant 0 : index
    %3 = memref.load %arg2[%c0_3] : memref<1xf32, #tpu.memory_space<smem>>
    %4 = vector.broadcast %3 : f32 to vector<16x4xf32>
    %5 = arith.mulf %2, %4 : vector<16x4xf32>
    %c0_4 = arith.constant 0 : index
    %c0_5 = arith.constant 0 : index
    %6 = vector.load %arg5[%c0_4, %c0_5] : memref<4x64xf32, #tpu.memory_space<vmem>>, vector<4x64xf32>
    %cst_6 = arith.constant dense<0.000000e+00> : vector<16x64xf32>
    %7 = tpu.matmul %5, %6, %cst_6 {dimension_numbers = #tpu.dot_dimension_numbers<[1], [0], [0], [1], [0, 0, 1, 1], [], []>} : vector<16x4xf32>, vector<4x64xf32>, vector<16x64xf32> -> vector<16x64xf32>
    %c0_7 = arith.constant 0 : index
    %c0_8 = arith.constant 0 : index
    %8 = vector.load %arg6[%c0_7, %c0_8] : memref<16x64xf32, #tpu.memory_space<vmem>>, vector<16x64xf32>
    tpu.vector_store %arg6[%c0_7, %c0_8], %7 {strides = array<i32>} : memref<16x64xf32, #tpu.memory_space<vmem>>, vector<16x64xf32>,
    return
  }
  func.func @transform_0(%arg0: i32, %arg1: i32, %arg2: memref<1xf32, #tpu.memory_space<smem>>) -> (i32, i32) {
    %c0_i32 = arith.constant 0 : i32
    %c0_i32_0 = arith.constant 0 : i32
    return %arg0, %c0_i32 : i32, i32
  }
  func.func @transform_1(%arg0: i32, %arg1: i32, %arg2: memref<1xf32, #tpu.memory_space<smem>>) -> (i32, i32) {
    %c0_i32 = arith.constant 0 : i32
    %c0_i32_0 = arith.constant 0 : i32
    %c0_i32_1 = arith.constant 0 : i32
    return %c0_i32, %c0_i32_0 : i32, i32
  }
  func.func @transform_2(%arg0: i32, %arg1: i32, %arg2: memref<1xf32, #tpu.memory_space<smem>>) -> (i32, i32) {
    %c0_i32 = arith.constant 0 : i32
    %c0_i32_0 = arith.constant 0 : i32
    return %c0_i32, %arg1 : i32, i32
  }
  func.func @transform_3(%arg0: i32, %arg1: i32, %arg2: memref<1xf32, #tpu.memory_space<smem>>) -> (i32, i32) {
    %c0_i32 = arith.constant 0 : i32
    return %arg0, %arg1 : i32, i32
  }
}

</mosaic_0001>

<llo_original>
// kernel: tpu_custom_call.1
$region0: #{tpu_custom_call.1}
  #allocation0 [shape = 'u32[]', space=smem, size = 0x4, offset = 0x4, fixed_abs, tag = 'smem constant byte address 0x4 - core index']
  #allocation1 [shape = 'u32[144,128]{1,0:T(1,128)}', space=vmem, size = 0x12000, scoped, tag = 'internal scratch']
  #allocation2 [shape = 's32[1]{0}', space=sflag, size = 0x4, scoped, tag = 'scoped memory for tpu_custom_call.1']
  #allocation3 [shape = 'f32[1]{0:T(128)S(6)}', space=smem, size = 0x200, scoped, tag = 'prefetched SMEM operand 0']
  %s0 = inlined_call_operand.<no memory space> [shape: f32[1], index: 0, kind: input, shape index: {}]
  %s1 = inlined_call_operand.vmem [shape: f32[16,32], index: 1, kind: input, shape index: {}]
  %s2 = inlined_call_operand.vmem [shape: f32[32,4], index: 2, kind: input, shape index: {}]
  %s3 = inlined_call_operand.vmem [shape: f32[4,64], index: 3, kind: input, shape index: {}]
  %s4 = inlined_call_operand.hbm [shape: f32[16,64], index: 4, kind: output, shape index: {}]
  %s5 = sld [smem:[#allocation0]]
  $region22: #{tpu_custom_call.1} parent=0
    _
  %s7 = ssub.s32 1, %s5
  %s8 = scalar_select 0, %s7, %s5
  %9 = sst [smem:[#allocation3]] %s0
  $region1: #{tpu_custom_call.1} parent=0
    #allocation4 [shape = 'u8[8192]{0}', space=vmem, size = 0x2000, scoped, tag = 'output window, operand 0, single buffered']
    #allocation5 [shape = 's32[1]{0}', space=sflag, size = 0x4, scoped, tag = 'scoped memory for tpu_custom_call.1']
    %10 = vsyncpa [#allocation5], 0
    // Predicated region
    $region2: #{tpu_custom_call.1} parent=1 // pred_check
      _
    $region3: #{tpu_custom_call.1} parent=1 // pred_check_branch
      %12 = sbr.rel (0) target = $region5
    $region4: #{tpu_custom_call.1} parent=1 // pred_region
      _
    $region5: #{tpu_custom_call.1} parent=1 // pred_fallthru
      _
    // Predicated region
    $region6: #{tpu_custom_call.1} parent=1 // pred_check
      _
    $region7: #{tpu_custom_call.1} parent=1 // pred_check_branch
      %14 = sbr.rel (0) target = $region9
    $region8: #{tpu_custom_call.1} parent=1 // pred_region
      _
    $region9: #{tpu_custom_call.1} parent=1 // pred_fallthru
      _
    // Predicated region
    $region10: #{tpu_custom_call.1} parent=1 // pred_check
      _
    $region11: #{tpu_custom_call.1} parent=1 // pred_check_branch
      %16 = sbr.rel (0) target = $region13
    $region12: #{tpu_custom_call.1} parent=1 // pred_region
      _
    $region13: #{tpu_custom_call.1} parent=1 // pred_fallthru
      _
    %v17 = vld [vmem:[%s1] sm:$0xff]
    %v18 = vld [vmem:[%s1 + $0x8] sm:$0xff]
    %v19 = vld [vmem:[%s2] sm:$0xff]
    %v20 = vld [vmem:[%s2 + $0x8] sm:$0xff]
    %v21 = vld [vmem:[%s2 + $0x10] sm:$0xff]
    %v22 = vld [vmem:[%s2 + $0x18] sm:$0xff]
    %vm23 = vcmask 261120
    %v25 = vsel %vm23, %v17, 0
    %v28 = vsel %vm23, %v18, 0
    %30 = vmatprep.subr.mxu0 0.0
    %31 = vmatpush1.msra.mxu0 %v19
    %32 = vmatprep.subr.mxu0 0.0
    %33 = vmatpush1.msra.mxu0 %v20
    %34 = vmatprep.subr.mxu0 0.0
    %35 = vmatpush1.msra.mxu0 %v21
    %36 = vmatprep.subr.mxu0 0.0
    %37 = vmatpush1.msra.mxu0 %v22
    %38 = vmatprep.subr.mxu0 0.0
    %39 = vmatpush1.msra.mxu0 0.0
    %40 = vmatprep.subr.mxu0 0.0
    %41 = vmatpush1.msra.mxu0 0.0
    %42 = vmatprep.subr.mxu0 0.0
    %43 = vmatpush1.msra.mxu0 0.0
    %44 = vmatprep.subr.mxu0 0.0
    %45 = vmatpush1.msra.mxu0 0.0
    %46 = vmatprep.subr.mxu0 0.0
    %47 = vmatpush1.msra.mxu0 0.0
    %48 = vmatprep.subr.mxu0 0.0
    %49 = vmatpush1.msra.mxu0 0.0
    %50 = vmatprep.subr.mxu0 0.0
    %51 = vmatpush1.msra.mxu0 0.0
    %52 = vmatprep.subr.mxu0 0.0
    %53 = vmatpush1.msra.mxu0 0.0
    %54 = vmatprep.subr.mxu0 0.0
    %55 = vmatpush1.msra.mxu0 0.0
    %56 = vmatprep.subr.mxu0 0.0
    %57 = vmatpush1.msra.mxu0 0.0
    %58 = vmatprep.subr.mxu0 0.0
    %59 = vmatpush1.msra.mxu0 0.0
    %60 = vmatprep.subr.mxu0 0.0
    %61 = vmatpush1.msra.mxu0 0.0
    %62 = vmatprep.subr.mxu0 0.0
    %63 = vmatpush1.msra.mxu0 0.0
    %64 = vmatprep.subr.mxu0 0.0
    %65 = vmatpush1.msra.mxu0 0.0
    %66 = vmatprep.subr.mxu0 0.0
    %67 = vmatpush1.msra.mxu0 0.0
    %68 = vmatprep.subr.mxu0 0.0
    %69 = vmatpush1.msra.mxu0 0.0
    %70 = vmatprep.subr.mxu0 0.0
    %71 = vmatpush1.msra.mxu0 0.0
    %72 = vmatprep.subr.mxu0 0.0
    %73 = vmatpush1.msra.mxu0 0.0
    %74 = vmatprep.subr.mxu0 0.0
    %75 = vmatpush1.msra.mxu0 0.0
    %76 = vmatprep.subr.mxu0 0.0
    %77 = vmatpush1.msra.mxu0 0.0
    %78 = vmatprep.subr.mxu0 0.0
    %79 = vmatpush1.msra.mxu0 0.0
    %80 = vmatprep.subr.mxu0 0.0
    %81 = vmatpush1.msra.mxu0 0.0
    %82 = vmatprep.subr.mxu0 0.0
    %83 = vmatpush1.msra.mxu0 0.0
    %84 = vmatprep.subr.mxu0 0.0
    %85 = vmatpush1.msra.mxu0 0.0
    %86 = vmatprep.subr.mxu0 0.0
    %87 = vmatpush1.msra.mxu0 0.0
    %88 = vmatprep.subr.mxu0 0.0
    %89 = vmatpush1.msra.mxu0 0.0
    %90 = vmatprep.subr.mxu0 0.0
    %91 = vmatpush1.msra.mxu0 0.0
    %92 = vmatprep.subr.mxu0 0.0
    %93 = vmatpush1.msra.mxu0 0.0
    %94 = vmatprep.mubr.f32.mxu0 0.0
    %95 = vmatmul.mubr.f32.gmra.mrb[0].mxu0 %v25
    %v96 = vpop.f32.mrb[0].mxu0
    %v97 = vadd.f32 0.0, %v96
    %v98 = vpop.f32.mrb[0].mxu0
    %99 = vmatprep.mubr.f32.mxu0 0.0
    %100 = vmatmul.mubr.f32.gmra.mrb[0].mxu0 %v28
    %v101 = vpop.f32.mrb[0].mxu0
    %v102 = vadd.f32 0.0, %v101
    %v103 = vpop.f32.mrb[0].mxu0
    %104 = vdwg.mxu0
    %s105 = sld [smem:[#allocation3]]
    %v106 = vstv %s105
    %v107 = vmul.f32 %v97, %v106
    %v108 = vmul.f32 %v102, %v106
    %v109 = vld [vmem:[%s3] sm:$0xf]
    %vm110 = vcmask 31744
    %v112 = vsel %vm110, %v107, 0
    %v115 = vsel %vm110, %v108, 0
    %vm117 = vcmask 1043456
    %v119 = vsel %vm117, %v109, 0
    %121 = vmatprep.subr.mxu0 0.0
    %122 = vmatpush1.msra.mxu0 %v119
    %123 = vmatprep.subr.mxu0 0.0
    %124 = vmatpush1.msra.mxu0 0.0
    %125 = vmatprep.subr.mxu0 0.0
    %126 = vmatpush1.msra.mxu0 0.0
    %127 = vmatprep.subr.mxu0 0.0
    %128 = vmatpush1.msra.mxu0 0.0
    %129 = vmatprep.subr.mxu0 0.0
    %130 = vmatpush1.msra.mxu0 0.0
    %131 = vmatprep.subr.mxu0 0.0
    %132 = vmatpush1.msra.mxu0 0.0
    %133 = vmatprep.subr.mxu0 0.0
    %134 = vmatpush1.msra.mxu0 0.0
    %135 = vmatprep.subr.mxu0 0.0
    %136 = vmatpush1.msra.mxu0 0.0
    %137 = vmatprep.subr.mxu0 0.0
    %138 = vmatpush1.msra.mxu0 0.0
    %139 = vmatprep.subr.mxu0 0.0
    %140 = vmatpush1.msra.mxu0 0.0
    %141 = vmatprep.subr.mxu0 0.0
    %142 = vmatpush1.msra.mxu0 0.0
    %143 = vmatprep.subr.mxu0 0.0
    %144 = vmatpush1.msra.mxu0 0.0
    %145 = vmatprep.subr.mxu0 0.0
    %146 = vmatpush1.msra.mxu0 0.0
    %147 = vmatprep.subr.mxu0 0.0
    %148 = vmatpush1.msra.mxu0 0.0
    %149 = vmatprep.subr.mxu0 0.0
    %150 = vmatpush1.msra.mxu0 0.0
    %151 = vmatprep.subr.mxu0 0.0
    %152 = vmatpush1.msra.mxu0 0.0
    %153 = vmatprep.subr.mxu0 0.0
    %154 = vmatpush1.msra.mxu0 0.0
    %155 = vmatprep.subr.mxu0 0.0
    %156 = vmatpush1.msra.mxu0 0.0
    %157 = vmatprep.subr.mxu0 0.0
    %158 = vmatpush1.msra.mxu0 0.0
    %159 = vmatprep.subr.mxu0 0.0
    %160 = vmatpush1.msra.mxu0 0.0
    %161 = vmatprep.subr.mxu0 0.0
    %162 = vmatpush1.msra.mxu0 0.0
    %163 = vmatprep.subr.mxu0 0.0
    %164 = vmatpush1.msra.mxu0 0.0
    %165 = vmatprep.subr.mxu0 0.0
    %166 = vmatpush1.msra.mxu0 0.0
    %167 = vmatprep.subr.mxu0 0.0
    %168 = vmatpush1.msra.mxu0 0.0
    %169 = vmatprep.subr.mxu0 0.0
    %170 = vmatpush1.msra.mxu0 0.0
    %171 = vmatprep.subr.mxu0 0.0
    %172 = vmatpush1.msra.mxu0 0.0
    %173 = vmatprep.subr.mxu0 0.0
    %174 = vmatpush1.msra.mxu0 0.0
    %175 = vmatprep.subr.mxu0 0.0
    %176 = vmatpush1.msra.mxu0 0.0
    %177 = vmatprep.subr.mxu0 0.0
    %178 = vmatpush1.msra.mxu0 0.0
    %179 = vmatprep.subr.mxu0 0.0
    %180 = vmatpush1.msra.mxu0 0.0
    %181 = vmatprep.subr.mxu0 0.0
    %182 = vmatpush1.msra.mxu0 0.0
    %183 = vmatprep.subr.mxu0 0.0
    %184 = vmatpush1.msra.mxu0 0.0
    %185 = vmatprep.mubr.f32.mxu0 0.0
    %186 = vmatmul.mubr.f32.gmra.mrb[0].mxu0 %v112
    %v187 = vpop.f32.mrb[0].mxu0
    %v188 = vadd.f32 0.0, %v187
    %v189 = vpop.f32.mrb[0].mxu0
    %190 = vmatprep.mubr.f32.mxu0 0.0
    %191 = vmatmul.mubr.f32.gmra.mrb[0].mxu0 %v115
    %v192 = vpop.f32.mrb[0].mxu0
    %v193 = vadd.f32 0.0, %v192
    %v194 = vpop.f32.mrb[0].mxu0
    %195 = vdwg.mxu0
    %vm196 = vcmask 523264
    %197 = vst.msk [vmem:[#allocation4] sm:$0xff] %vm196, %v188
    %198 = vst.msk [vmem:[#allocation4 + $0x8] sm:$0xff] %vm196, %v193
    // Predicated region
    $region14: #{tpu_custom_call.1} parent=1 // pred_check
      _
    $region15: #{tpu_custom_call.1} parent=1 // pred_check_branch
      %200 = sbr.rel (0) target = $region17
    $region16: #{tpu_custom_call.1} parent=1 // pred_region
      %s202 = ssub.s32 256, 256
      %203 = vsyncadd [#allocation5], %s202
      %s204 = sshll.u32 [#allocation4], 4
      %s205 = int_to_ptr.vmem [resolvable:$true] %s204
      %210 = dma.vmem_to_hbm [thread:$0]  %s205, 256, %s4, [#allocation5], 128, 128, 8
    $region17: #{tpu_custom_call.1} parent=1 // pred_fallthru
      _
    // Predicated region
    $region18: #{tpu_custom_call.1} parent=1 // pred_check
      _
    $region19: #{tpu_custom_call.1} parent=1 // pred_check_branch
      %212 = sbr.rel (0) target = $region21
    $region20: #{tpu_custom_call.1} parent=1 // pred_region
      %213 = dma.done [#allocation5], 256
    $region21: #{tpu_custom_call.1} parent=1 // pred_fallthru
      _
    %214 = vsyncpa [#allocation5], 1

</llo_original>
